<compile_context>
chip_gen: v7x
topology: tpu7x:2x2x1
jax: 0.10.0
libtpu: 0.0.40
codegen_flags: <defaults>
</compile_context>

<pallas_src>
import jax
import jax.numpy as jnp
import numpy as np
from jax.experimental import pallas as pl
from jax.experimental.pallas import tpu as pltpu

WINDOW_SIZE = 16                         # stand-in for options.window_size
IN_NODES = (WINDOW_SIZE - 2) * 4 + 2     # 58
N_FEAT = WINDOW_SIZE * 4 + 2             # 66 (conv folded -> full window + 2 scalars)
BN_EPS = 1e-5


# -----------------------------------------------------------------------------
# Pallas kernel: 3 feature-major matmuls + VPU/EUP epilogue
# -----------------------------------------------------------------------------
def motifnet_kernel(x_ref,     # (66, bb)  VMEM  feature-major input tile (batch on lanes)
                    w1_ref,    # (38, 66)  VMEM  fc1^T with conv Toeplitz + BN1 folded
                    b1_ref,    # (38, 1)   VMEM  fc1 bias (conv bias + BN1 folded)
                    w2_ref,    # (20, 38)  VMEM  fc2^T (BN2 folded)
                    b2_ref,    # (20, 1)   VMEM  fc2 bias (BN2 folded)
                    w3_ref,    # (2, 20)   VMEM  out^T
                    b3_ref,    # (2, 1)    VMEM  out bias
                    out_ref):  # (2, bb)   VMEM  lane-dense log_softmax output tile
    # fc1 (conv + flatten + concat-scalars + BN1 already folded into w1/b1) + relu
    h = jnp.dot(w1_ref[...], x_ref[...], preferred_element_type=jnp.float32) + b1_ref[...]
    h = jnp.maximum(h, 0.0)                       # dropout = identity in eval mode

    # fc2 (+ folded BN2) + relu
    h = jnp.dot(w2_ref[...], h, preferred_element_type=jnp.float32) + b2_ref[...]
    h = jnp.maximum(h, 0.0)

    # output layer + closed-form 2-class log_softmax (no cross-lane reductions):
    #   lse = logits0 + softplus(logits1 - logits0);  out = logits - lse
    logits = jnp.dot(w3_ref[...], h, preferred_element_type=jnp.float32) + b3_ref[...]
    d = logits[1:2, :] - logits[0:1, :]
    softplus_d = jnp.maximum(d, 0.0) + jnp.log1p(jnp.exp(-jnp.abs(d)))   # stable softplus
    lse = logits[0:1, :] + softplus_d
    out_ref[...] = logits - lse


# -----------------------------------------------------------------------------
# Parameter folding: Conv1d -> fc1 Toeplitz, BatchNorm -> Linear, then transpose
# -----------------------------------------------------------------------------
def _fold_params(p, W):
    L = W - 2

    # eval-mode BatchNorm1d folded into the preceding Linear layers
    s1 = p["g1"] / jnp.sqrt(p["v1"] + BN_EPS)
    w1f = p["w1"] * s1[None, :]                                           # (58, 38)
    b1f = (p["b1"] - p["m1"]) * s1 + p["be1"]                             # (38,)
    s2 = p["g2"] / jnp.sqrt(p["v2"] + BN_EPS)
    w2f = p["w2"] * s2[None, :]                                           # (38, 20)
    b2f = (p["b2"] - p["m2"]) * s2 + p["be2"]                             # (20,)

    # depthwise conv folded into fc1 (Toeplitz combine).  Reference flatten of the conv
    # output is channel-major (row c*L + t); the kernel's x flatten is position-major
    # (row w*4 + c):  W1_eff[(t+k)*4 + c, :] += conv_w[c, k] * w1f[c*L + t, :]
    w1_dna = w1f[: 4 * L].reshape(4, L, 38)                               # [c, t, n]
    w1_dna_t = jnp.transpose(w1_dna, (1, 0, 2))                           # [t, c, n]
    w_pos = jnp.zeros((W, 4, 38), jnp.float32)                            # [w, c, n]
    for k in range(3):
        w_pos = w_pos.at[k:k + L].add(p["conv_w"][None, :, k, None] * w1_dna_t)
    # stack the [c_prot, i_prot] fc1 rows under the DNA rows -> single 66-row weight
    w1_eff = jnp.concatenate([w_pos.reshape(W * 4, 38), w1f[4 * L:]], axis=0)  # (66, 38)
    # conv bias routed through fc1 into the bias
    b1_eff = b1f + jnp.sum(w1_dna * p["conv_b"][:, None, None], axis=(0, 1))

    return dict(
        w1T=jnp.transpose(w1_eff),          # (38, 66)
        b1=b1_eff.reshape(38, 1),
        w2T=jnp.transpose(w2f),             # (20, 38)
        b2=b2f.reshape(20, 1),
        w3T=jnp.transpose(p["w3"]),         # (2, 20)
        b3=p["b3"].reshape(2, 1),
    )


# -----------------------------------------------------------------------------
# Wrapper: feature-major relayout + batch-(lane-)tiled pallas_call
# -----------------------------------------------------------------------------
def motifnet_forward(x, c_prot, i_prot, p, block_b=8192):
    B, W, C = x.shape
    assert C == 4 and W == WINDOW_SIZE
    F = W * 4 + 2                                                          # 66

    fp = _fold_params(p, W)

    # fold [c_prot, i_prot] into the x stream -> (B, 66); single relayout below.
    xc = jnp.concatenate([x.reshape(B, W * 4),
                          c_prot.reshape(B, -1),
                          i_prot.reshape(B, -1)], axis=1).astype(jnp.float32)

    # batch lives on the lane axis: a lane tile must be a multiple of 128 unless the
    # single tile spans the whole (padded) batch.
    bb = min(int(block_b), B)
    if bb < B:
        bb = max(128, (bb // 128) * 128)
    n_steps = pl.cdiv(B, bb)
    Bp = n_steps * bb
    if Bp != B:
        xc = jnp.pad(xc, ((0, Bp - B), (0, 0)))
    # pad + transpose fuse into the one relayout copy XLA inserts anyway; ideally the
    # caller supplies this (F, B) layout directly (see TODO at top of file).
    x_fm = jnp.transpose(xc)                                               # (66, Bp)

    const = lambda i: (0, 0)   # weights/biases: same block every step -> VMEM-resident
    cost = pl.CostEstimate(
        flops=2 * Bp * (F * 38 + 38 * 20 + 20 * 2),
        transcendentals=2 * Bp,
        bytes_accessed=4 * (F * Bp + 2 * Bp + 38 * F + 38 + 20 * 38 + 20 + 2 * 20 + 2),
    )

    out = pl.pallas_call(
        motifnet_kernel,
        out_shape=jax.ShapeDtypeStruct((2, Bp), jnp.float32),
        grid=(n_steps,),
        in_specs=[
            pl.BlockSpec((F, bb), lambda i: (0, i)),
            pl.BlockSpec((38, F), const),
            pl.BlockSpec((38, 1), const),
            pl.BlockSpec((20, 38), const),
            pl.BlockSpec((20, 1), const),
            pl.BlockSpec((2, 20), const),
            pl.BlockSpec((2, 1), const),
        ],
        out_specs=pl.BlockSpec((2, bb), lambda i: (0, i)),
        compiler_params=pltpu.CompilerParams(dimension_semantics=("parallel",)),
        cost_estimate=cost,
    )(x_fm, fp["w1T"], fp["b1"], fp["w2T"], fp["b2"], fp["w3T"], fp["b3"])

    # external contract matches the PyTorch module: (B, 2) log-probs.  Callers that can
    # consume the lane-dense (2, B) slab directly should take `out[:, :B]` instead.
    return jnp.transpose(out[:, :B])


# -----------------------------------------------------------------------------
# Pure-JAX reference (mirrors the PyTorch forward, eval mode) for validation
# -----------------------------------------------------------------------------
def motifnet_ref(x, c_prot, i_prot, p):
    B, W, _ = x.shape
    L = W - 2
    xt = jnp.transpose(x, (0, 2, 1))                                       # (B, 4, W) NCW
    conv = jnp.stack(
        [xt[:, c, 0:L] * p["conv_w"][c, 0]
         + xt[:, c, 1:L + 1] * p["conv_w"][c, 1]
         + xt[:, c, 2:L + 2] * p["conv_w"][c, 2]
         + p["conv_b"][c] for c in range(4)], axis=1)                      # (B, 4, L)
    h = conv.reshape(B, -1)
    h = jnp.concatenate([h, c_prot.reshape(B, -1), i_prot.reshape(B, -1)], axis=1)

    def bn(z, g, b, m, v):
        return g * (z - m) / jnp.sqrt(v + BN_EPS) + b

    h = jax.nn.relu(bn(h @ p["w1"] + p["b1"], p["g1"], p["be1"], p["m1"], p["v1"]))
    h = jax.nn.relu(bn(h @ p["w2"] + p["b2"], p["g2"], p["be2"], p["m2"], p["v2"]))
    logits = h @ p["w3"] + p["b3"]
    return jax.nn.log_softmax(logits, axis=1)


# -----------------------------------------------------------------------------
# Deterministic synthetic parameters (shapes from MotifNet.__init__)
# -----------------------------------------------------------------------------
def init_params(key):
    ks = jax.random.split(key, 16)

    def u(k, shape, scale=0.3):
        return jax.random.uniform(k, shape, jnp.float32, -scale, scale)

    return {
        # Conv1d(4, 4, 3, groups=4): weight (4, 1, 3) -> (4, 3), bias (4,)
        "conv_w": u(ks[0], (4, 3)),
        "conv_b": u(ks[1], (4,)),
        # Linear(58, 38) stored as (in, out), BatchNorm1d(38)
        "w1": u(ks[2], (IN_NODES, 38), 0.2),
        "b1": u(ks[3], (38,)),
        "g1": 1.0 + u(ks[4], (38,), 0.1),
        "be1": u(ks[5], (38,), 0.1),
        "m1": u(ks[6], (38,), 0.2),
        "v1": 0.5 + jax.random.uniform(ks[7], (38,), jnp.float32, 0.0, 1.0),
        # Linear(38, 20), BatchNorm1d(20)
        "w2": u(ks[8], (38, 20), 0.2),
        "b2": u(ks[9], (20,)),
        "g2": 1.0 + u(ks[10], (20,), 0.1),
        "be2": u(ks[11], (20,), 0.1),
        "m2": u(ks[12], (20,), 0.2),
        "v2": 0.5 + jax.random.uniform(ks[13], (20,), jnp.float32, 0.0, 1.0),
        # Linear(20, 2)
        "w3": u(ks[14], (20, 2), 0.3),
        "b3": u(ks[15], (2,)),
    }


if __name__ == "__main__":
    key = jax.random.PRNGKey(0)
    kx, kc, ki, kp = jax.random.split(key, 4)
    params = init_params(kp)

    # --- small single-tile case (batch=2) ---
    B = 2
    x = jax.random.normal(kx, (B, WINDOW_SIZE, 4), jnp.float32)   # (B, window, 4)
    c_prot = jax.random.normal(kc, (B, 1), jnp.float32)
    i_prot = jax.random.normal(ki, (B, 1), jnp.float32)

    out = motifnet_forward(x, c_prot, i_prot, params)
    out = jax.block_until_ready(out)
    ref = motifnet_ref(x, c_prot, i_prot, params)
    np.testing.assert_allclose(np.asarray(out), np.asarray(ref), rtol=1e-4, atol=1e-5)

    # --- multi-step grid + ragged-tail padding case (batch=300, lane tile=128) ---
    kx2, kc2, ki2 = jax.random.split(jax.random.PRNGKey(1), 3)
    B2 = 300
    x2 = jax.random.normal(kx2, (B2, WINDOW_SIZE, 4), jnp.float32)
    c2 = jax.random.normal(kc2, (B2, 1), jnp.float32)
    i2 = jax.random.normal(ki2, (B2, 1), jnp.float32)
    out2 = jax.block_until_ready(motifnet_forward(x2, c2, i2, params, block_b=128))
    ref2 = motifnet_ref(x2, c2, i2, params)
    np.testing.assert_allclose(np.asarray(out2), np.asarray(ref2), rtol=1e-4, atol=1e-5)

    print("KERNEL_OK")
</pallas_src>

<mosaic_0001>
module attributes {stable_mosaic.version = 11 : i64} {
  func.func @motifnet_kernel(%arg0: i32, %arg1: memref<66x2xf32, #tpu.memory_space<vmem>>, %arg2: memref<38x66xf32, #tpu.memory_space<vmem>>, %arg3: memref<38x1xf32, #tpu.memory_space<vmem>>, %arg4: memref<20x38xf32, #tpu.memory_space<vmem>>, %arg5: memref<20x1xf32, #tpu.memory_space<vmem>>, %arg6: memref<2x20xf32, #tpu.memory_space<vmem>>, %arg7: memref<2x1xf32, #tpu.memory_space<vmem>>, %arg8: memref<2x2xf32, #tpu.memory_space<vmem>>) attributes {dimension_semantics = [#tpu.dimension_semantics<parallel>], iteration_bounds = array<i64: 1>, scalar_prefetch = 0 : i64, scratch_operands = 0 : i64, tpu.core_type = #tpu.core_type<tc>, window_params = [{transform_indices = @transform_0, window_bounds = array<i64: 66, 2>}, {pipeline_mode = #tpu.pipeline_mode<synchronous>, transform_indices = @transform_1, window_bounds = array<i64: 38, 66>}, {pipeline_mode = #tpu.pipeline_mode<synchronous>, transform_indices = @transform_2, window_bounds = array<i64: 38, 1>}, {pipeline_mode = #tpu.pipeline_mode<synchronous>, transform_indices = @transform_3, window_bounds = array<i64: 20, 38>}, {pipeline_mode = #tpu.pipeline_mode<synchronous>, transform_indices = @transform_4, window_bounds = array<i64: 20, 1>}, {pipeline_mode = #tpu.pipeline_mode<synchronous>, transform_indices = @transform_5, window_bounds = array<i64: 2, 20>}, {pipeline_mode = #tpu.pipeline_mode<synchronous>, transform_indices = @transform_6, window_bounds = array<i64: 2, 1>}, {transform_indices = @transform_7, window_bounds = array<i64: 2, 2>}]} {
    %c0 = arith.constant 0 : index
    %c0_0 = arith.constant 0 : index
    %0 = vector.load %arg2[%c0, %c0_0] : memref<38x66xf32, #tpu.memory_space<vmem>>, vector<38x66xf32>
    %c0_1 = arith.constant 0 : index
    %c0_2 = arith.constant 0 : index
    %1 = vector.load %arg1[%c0_1, %c0_2] : memref<66x2xf32, #tpu.memory_space<vmem>>, vector<66x2xf32>
    %cst = arith.constant dense<0.000000e+00> : vector<38x2xf32>
    %2 = tpu.matmul %0, %1, %cst {dimension_numbers = #tpu.dot_dimension_numbers<[1], [0], [0], [1], [0, 0, 1, 1], [], []>} : vector<38x66xf32>, vector<66x2xf32>, vector<38x2xf32> -> vector<38x2xf32>
    %c0_3 = arith.constant 0 : index
    %c0_4 = arith.constant 0 : index
    %3 = vector.load %arg3[%c0_3, %c0_4] : memref<38x1xf32, #tpu.memory_space<vmem>>, vector<38x1xf32>
    %4 = vector.broadcast %3 : vector<38x1xf32> to vector<38x2xf32>
    %5 = arith.addf %2, %4 : vector<38x2xf32>
    %cst_5 = arith.constant 0.000000e+00 : f32
    %6 = vector.broadcast %cst_5 : f32 to vector<38x2xf32>
    %7 = arith.maximumf %5, %6 : vector<38x2xf32>
    %c0_6 = arith.constant 0 : index
    %c0_7 = arith.constant 0 : index
    %8 = vector.load %arg4[%c0_6, %c0_7] : memref<20x38xf32, #tpu.memory_space<vmem>>, vector<20x38xf32>
    %cst_8 = arith.constant dense<0.000000e+00> : vector<20x2xf32>
    %9 = tpu.matmul %8, %7, %cst_8 {dimension_numbers = #tpu.dot_dimension_numbers<[1], [0], [0], [1], [0, 0, 1, 1], [], []>} : vector<20x38xf32>, vector<38x2xf32>, vector<20x2xf32> -> vector<20x2xf32>
    %c0_9 = arith.constant 0 : index
    %c0_10 = arith.constant 0 : index
    %10 = vector.load %arg5[%c0_9, %c0_10] : memref<20x1xf32, #tpu.memory_space<vmem>>, vector<20x1xf32>
    %11 = vector.broadcast %10 : vector<20x1xf32> to vector<20x2xf32>
    %12 = arith.addf %9, %11 : vector<20x2xf32>
    %cst_11 = arith.constant 0.000000e+00 : f32
    %13 = vector.broadcast %cst_11 : f32 to vector<20x2xf32>
    %14 = arith.maximumf %12, %13 : vector<20x2xf32>
    %c0_12 = arith.constant 0 : index
    %c0_13 = arith.constant 0 : index
    %15 = vector.load %arg6[%c0_12, %c0_13] : memref<2x20xf32, #tpu.memory_space<vmem>>, vector<2x20xf32>
    %cst_14 = arith.constant dense<0.000000e+00> : vector<2x2xf32>
    %16 = tpu.matmul %15, %14, %cst_14 {dimension_numbers = #tpu.dot_dimension_numbers<[1], [0], [0], [1], [0, 0, 1, 1], [], []>} : vector<2x20xf32>, vector<20x2xf32>, vector<2x2xf32> -> vector<2x2xf32>
    %c0_15 = arith.constant 0 : index
    %c0_16 = arith.constant 0 : index
    %17 = vector.load %arg7[%c0_15, %c0_16] : memref<2x1xf32, #tpu.memory_space<vmem>>, vector<2x1xf32>
    %18 = vector.broadcast %17 : vector<2x1xf32> to vector<2x2xf32>
    %19 = arith.addf %16, %18 : vector<2x2xf32>
    %20 = vector.extract_strided_slice %19 {offsets = [1, 0], sizes = [1, 2], strides = [1, 1]} : vector<2x2xf32> to vector<1x2xf32>
    %21 = vector.extract_strided_slice %19 {offsets = [0, 0], sizes = [1, 2], strides = [1, 1]} : vector<2x2xf32> to vector<1x2xf32>
    %22 = arith.subf %20, %21 : vector<1x2xf32>
    %cst_17 = arith.constant 0.000000e+00 : f32
    %23 = vector.broadcast %cst_17 : f32 to vector<1x2xf32>
    %24 = arith.maximumf %22, %23 : vector<1x2xf32>
    %25 = math.absf %22 : vector<1x2xf32>
    %cst_18 = arith.constant 0.000000e+00 : f32
    %26 = vector.broadcast %cst_18 : f32 to vector<1x2xf32>
    %27 = arith.subf %26, %25 : vector<1x2xf32>
    %28 = math.exp %27 : vector<1x2xf32>
    %29 = math.log1p %28 : vector<1x2xf32>
    %30 = arith.addf %24, %29 : vector<1x2xf32>
    %31 = vector.extract_strided_slice %19 {offsets = [0, 0], sizes = [1, 2], strides = [1, 1]} : vector<2x2xf32> to vector<1x2xf32>
    %32 = arith.addf %31, %30 : vector<1x2xf32>
    %33 = vector.broadcast %32 : vector<1x2xf32> to vector<2x2xf32>
    %34 = arith.subf %19, %33 : vector<2x2xf32>
    %c0_19 = arith.constant 0 : index
    %c0_20 = arith.constant 0 : index
    %35 = vector.load %arg8[%c0_19, %c0_20] : memref<2x2xf32, #tpu.memory_space<vmem>>, vector<2x2xf32>
    tpu.vector_store %arg8[%c0_19, %c0_20], %34 {strides = array<i32>} : memref<2x2xf32, #tpu.memory_space<vmem>>, vector<2x2xf32>,
    return
  }
  func.func @transform_0(%arg0: i32) -> (i32, i32) {
    %c0_i32 = arith.constant 0 : i32
    %c0_i32_0 = arith.constant 0 : i32
    return %c0_i32, %arg0 : i32, i32
  }
  func.func @transform_1(%arg0: i32) -> (i32, i32) {
    %c0_i32 = arith.constant 0 : i32
    %c0_i32_0 = arith.constant 0 : i32
    %c0_i32_1 = arith.constant 0 : i32
    return %c0_i32, %c0_i32_0 : i32, i32
  }
  func.func @transform_2(%arg0: i32) -> (i32, i32) {
    %c0_i32 = arith.constant 0 : i32
    %c0_i32_0 = arith.constant 0 : i32
    %c0_i32_1 = arith.constant 0 : i32
    return %c0_i32, %c0_i32_0 : i32, i32
  }
  func.func @transform_3(%arg0: i32) -> (i32, i32) {
    %c0_i32 = arith.constant 0 : i32
    %c0_i32_0 = arith.constant 0 : i32
    %c0_i32_1 = arith.constant 0 : i32
    return %c0_i32, %c0_i32_0 : i32, i32
  }
  func.func @transform_4(%arg0: i32) -> (i32, i32) {
    %c0_i32 = arith.constant 0 : i32
    %c0_i32_0 = arith.constant 0 : i32
    %c0_i32_1 = arith.constant 0 : i32
    return %c0_i32, %c0_i32_0 : i32, i32
  }
  func.func @transform_5(%arg0: i32) -> (i32, i32) {
    %c0_i32 = arith.constant 0 : i32
    %c0_i32_0 = arith.constant 0 : i32
    %c0_i32_1 = arith.constant 0 : i32
    return %c0_i32, %c0_i32_0 : i32, i32
  }
  func.func @transform_6(%arg0: i32) -> (i32, i32) {
    %c0_i32 = arith.constant 0 : i32
    %c0_i32_0 = arith.constant 0 : i32
    %c0_i32_1 = arith.constant 0 : i32
    return %c0_i32, %c0_i32_0 : i32, i32
  }
  func.func @transform_7(%arg0: i32) -> (i32, i32) {
    %c0_i32 = arith.constant 0 : i32
    %c0_i32_0 = arith.constant 0 : i32
    return %c0_i32, %arg0 : i32, i32
  }
}

</mosaic_0001>

<llo_original>
// kernel: tpu_custom_call.1
$region0: #{tpu_custom_call.1}
  #allocation0 [shape = 'u32[]', space=smem, size = 0x4, offset = 0x4, fixed_abs, tag = 'smem constant byte address 0x4 - core index']
  #allocation1 [shape = 'u32[144,128]{1,0:T(1,128)}', space=vmem, size = 0x12000, scoped, tag = 'internal scratch']
  %s0 = inlined_call_operand.vmem [shape: f32[66,2], index: 0, kind: input, shape index: {}]
  %s1 = inlined_call_operand.vmem [shape: f32[38,66], index: 1, kind: input, shape index: {}]
  %s2 = inlined_call_operand.vmem [shape: f32[38,1], index: 2, kind: input, shape index: {}]
  %s3 = inlined_call_operand.vmem [shape: f32[20,38], index: 3, kind: input, shape index: {}]
  %s4 = inlined_call_operand.vmem [shape: f32[20,1], index: 4, kind: input, shape index: {}]
  %s5 = inlined_call_operand.vmem [shape: f32[2,20], index: 5, kind: input, shape index: {}]
  %s6 = inlined_call_operand.vmem [shape: f32[2,1], index: 6, kind: input, shape index: {}]
  %s7 = inlined_call_operand.hbm [shape: f32[2,2], index: 7, kind: output, shape index: {}]
  %s8 = sld [smem:[#allocation0]]
  $region38: #{tpu_custom_call.1} parent=0
    _
  %s10 = ssub.s32 1, %s8
  %s11 = scalar_select 0, %s10, %s8
  $region1: #{tpu_custom_call.1} parent=0
    #allocation2 [shape = 'u8[1024]{0}', space=vmem, size = 0x400, scoped, tag = 'output window, operand 0, single buffered']
    #allocation3 [shape = 's32[1]{0}', space=sflag, size = 0x4, scoped, tag = 'scoped memory for tpu_custom_call.1']
    %12 = vsyncpa [#allocation3], 0
    // Predicated region
    $region2: #{tpu_custom_call.1} parent=1 // pred_check
      _
    $region3: #{tpu_custom_call.1} parent=1 // pred_check_branch
      %14 = sbr.rel (0) target = $region5
    $region4: #{tpu_custom_call.1} parent=1 // pred_region
      _
    $region5: #{tpu_custom_call.1} parent=1 // pred_fallthru
      _
    // Predicated region
    $region6: #{tpu_custom_call.1} parent=1 // pred_check
      _
    $region7: #{tpu_custom_call.1} parent=1 // pred_check_branch
      %16 = sbr.rel (0) target = $region9
    $region8: #{tpu_custom_call.1} parent=1 // pred_region
      _
    $region9: #{tpu_custom_call.1} parent=1 // pred_fallthru
      _
    // Predicated region
    $region10: #{tpu_custom_call.1} parent=1 // pred_check
      _
    $region11: #{tpu_custom_call.1} parent=1 // pred_check_branch
      %18 = sbr.rel (0) target = $region13
    $region12: #{tpu_custom_call.1} parent=1 // pred_region
      _
    $region13: #{tpu_custom_call.1} parent=1 // pred_fallthru
      _
    // Predicated region
    $region14: #{tpu_custom_call.1} parent=1 // pred_check
      _
    $region15: #{tpu_custom_call.1} parent=1 // pred_check_branch
      %20 = sbr.rel (0) target = $region17
    $region16: #{tpu_custom_call.1} parent=1 // pred_region
      _
    $region17: #{tpu_custom_call.1} parent=1 // pred_fallthru
      _
    // Predicated region
    $region18: #{tpu_custom_call.1} parent=1 // pred_check
      _
    $region19: #{tpu_custom_call.1} parent=1 // pred_check_branch
      %22 = sbr.rel (0) target = $region21
    $region20: #{tpu_custom_call.1} parent=1 // pred_region
      _
    $region21: #{tpu_custom_call.1} parent=1 // pred_fallthru
      _
    // Predicated region
    $region22: #{tpu_custom_call.1} parent=1 // pred_check
      _
    $region23: #{tpu_custom_call.1} parent=1 // pred_check_branch
      %24 = sbr.rel (0) target = $region25
    $region24: #{tpu_custom_call.1} parent=1 // pred_region
      _
    $region25: #{tpu_custom_call.1} parent=1 // pred_fallthru
      _
    // Predicated region
    $region26: #{tpu_custom_call.1} parent=1 // pred_check
      _
    $region27: #{tpu_custom_call.1} parent=1 // pred_check_branch
      %26 = sbr.rel (0) target = $region29
    $region28: #{tpu_custom_call.1} parent=1 // pred_region
      _
    $region29: #{tpu_custom_call.1} parent=1 // pred_fallthru
      _
    %v27 = vld [vmem:[%s1] sm:$0xff]
    %v28 = vld [vmem:[%s1 + $0x8] sm:$0xff]
    %v29 = vld [vmem:[%s1 + $0x10] sm:$0xff]
    %v30 = vld [vmem:[%s1 + $0x18] sm:$0xff]
    %v31 = vld [vmem:[%s1 + $0x20] sm:$0x3f]
    %v32 = vld [vmem:[%s0] sm:$0xff]
    %v33 = vld [vmem:[%s0 + $0x8] sm:$0xff]
    %v34 = vld [vmem:[%s0 + $0x10] sm:$0xff]
    %v35 = vld [vmem:[%s0 + $0x18] sm:$0xff]
    %v36 = vld [vmem:[%s0 + $0x20] sm:$0xff]
    %v37 = vld [vmem:[%s0 + $0x28] sm:$0xff]
    %v38 = vld [vmem:[%s0 + $0x30] sm:$0xff]
    %v39 = vld [vmem:[%s0 + $0x38] sm:$0xff]
    %v40 = vld [vmem:[%s0 + $0x40] sm:$0x3]
    %v41 = vld [vmem:[%s2] sm:$0xff]
    %v42 = vld [vmem:[%s2 + $0x8] sm:$0xff]
    %v43 = vld [vmem:[%s2 + $0x10] sm:$0xff]
    %v44 = vld [vmem:[%s2 + $0x18] sm:$0xff]
    %v45 = vld [vmem:[%s2 + $0x20] sm:$0x3f]
    %47 = vset.pattern.permute.xlu0 0
    %48 = vperm.xlu0 %47, %v41
    %v49 = vpop.permute.xlu0 %48
    %52 = vset.pattern.permute.xlu0 0
    %53 = vperm.xlu0 %52, %v42
    %v54 = vpop.permute.xlu0 %53
    %57 = vset.pattern.permute.xlu0 0
    %58 = vperm.xlu0 %57, %v43
    %v59 = vpop.permute.xlu0 %58
    %62 = vset.pattern.permute.xlu0 0
    %63 = vperm.xlu0 %62, %v44
    %v64 = vpop.permute.xlu0 %63
    %67 = vset.pattern.permute.xlu0 0
    %68 = vperm.xlu0 %67, %v45
    %v69 = vpop.permute.xlu0 %68
    %vm71 = vcmask 539648
    %v73 = vsel %vm71, %v27, 0
    %v76 = vsel %vm71, %v28, 0
    %v79 = vsel %vm71, %v29, 0
    %v82 = vsel %vm71, %v30, 0
    %v85 = vsel %vm71, %v31, 0
    %vm87 = vcmask 1041408
    %v89 = vsel %vm87, %v40, 0
    %91 = vmatprep.subr.mxu0 0.0
    %92 = vmatpush1.msra.mxu0 %v32
    %93 = vmatprep.subr.mxu0 0.0
    %94 = vmatpush1.msra.mxu0 %v33
    %95 = vmatprep.subr.mxu0 0.0
    %96 = vmatpush1.msra.mxu0 %v34
    %97 = vmatprep.subr.mxu0 0.0
    %98 = vmatpush1.msra.mxu0 %v35
    %99 = vmatprep.subr.mxu0 0.0
    %100 = vmatpush1.msra.mxu0 %v36
    %101 = vmatprep.subr.mxu0 0.0
    %102 = vmatpush1.msra.mxu0 %v37
    %103 = vmatprep.subr.mxu0 0.0
    %104 = vmatpush1.msra.mxu0 %v38
    %105 = vmatprep.subr.mxu0 0.0
    %106 = vmatpush1.msra.mxu0 %v39
    %107 = vmatprep.subr.mxu0 0.0
    %108 = vmatpush1.msra.mxu0 %v89
    %109 = vmatprep.subr.mxu0 0.0
    %110 = vmatpush1.msra.mxu0 0.0
    %111 = vmatprep.subr.mxu0 0.0
    %112 = vmatpush1.msra.mxu0 0.0
    %113 = vmatprep.subr.mxu0 0.0
    %114 = vmatpush1.msra.mxu0 0.0
    %115 = vmatprep.subr.mxu0 0.0
    %116 = vmatpush1.msra.mxu0 0.0
    %117 = vmatprep.subr.mxu0 0.0
    %118 = vmatpush1.msra.mxu0 0.0
    %119 = vmatprep.subr.mxu0 0.0
    %120 = vmatpush1.msra.mxu0 0.0
    %121 = vmatprep.subr.mxu0 0.0
    %122 = vmatpush1.msra.mxu0 0.0
    %123 = vmatprep.subr.mxu0 0.0
    %124 = vmatpush1.msra.mxu0 0.0
    %125 = vmatprep.subr.mxu0 0.0
    %126 = vmatpush1.msra.mxu0 0.0
    %127 = vmatprep.subr.mxu0 0.0
    %128 = vmatpush1.msra.mxu0 0.0
    %129 = vmatprep.subr.mxu0 0.0
    %130 = vmatpush1.msra.mxu0 0.0
    %131 = vmatprep.subr.mxu0 0.0
    %132 = vmatpush1.msra.mxu0 0.0
    %133 = vmatprep.subr.mxu0 0.0
    %134 = vmatpush1.msra.mxu0 0.0
    %135 = vmatprep.subr.mxu0 0.0
    %136 = vmatpush1.msra.mxu0 0.0
    %137 = vmatprep.subr.mxu0 0.0
    %138 = vmatpush1.msra.mxu0 0.0
    %139 = vmatprep.subr.mxu0 0.0
    %140 = vmatpush1.msra.mxu0 0.0
    %141 = vmatprep.subr.mxu0 0.0
    %142 = vmatpush1.msra.mxu0 0.0
    %143 = vmatprep.subr.mxu0 0.0
    %144 = vmatpush1.msra.mxu0 0.0
    %145 = vmatprep.subr.mxu0 0.0
    %146 = vmatpush1.msra.mxu0 0.0
    %147 = vmatprep.subr.mxu0 0.0
    %148 = vmatpush1.msra.mxu0 0.0
    %149 = vmatprep.subr.mxu0 0.0
    %150 = vmatpush1.msra.mxu0 0.0
    %151 = vmatprep.subr.mxu0 0.0
    %152 = vmatpush1.msra.mxu0 0.0
    %153 = vmatprep.subr.mxu0 0.0
    %154 = vmatpush1.msra.mxu0 0.0
    %155 = vmatprep.mubr.f32.mxu0 0.0
    %156 = vmatmul.mubr.f32.gmra.mrb[0].mxu0 %v73
    %v157 = vpop.f32.mrb[0].mxu0
    %v158 = vadd.f32 %v49, %v157
    %v159 = vpop.f32.mrb[0].mxu0
    %160 = vmatprep.mubr.f32.mxu0 0.0
    %161 = vmatmul.mubr.f32.gmra.mrb[0].mxu0 %v76
    %v162 = vpop.f32.mrb[0].mxu0
    %v163 = vadd.f32 %v54, %v162
    %v164 = vpop.f32.mrb[0].mxu0
    %165 = vmatprep.mubr.f32.mxu0 0.0
    %166 = vmatmul.mubr.f32.gmra.mrb[0].mxu0 %v79
    %v167 = vpop.f32.mrb[0].mxu0
    %v168 = vadd.f32 %v59, %v167
    %v169 = vpop.f32.mrb[0].mxu0
    %170 = vmatprep.mubr.f32.mxu0 0.0
    %171 = vmatmul.mubr.f32.gmra.mrb[0].mxu0 %v82
    %v172 = vpop.f32.mrb[0].mxu0
    %v173 = vadd.f32 %v64, %v172
    %v174 = vpop.f32.mrb[0].mxu0
    %175 = vmatprep.mubr.f32.mxu0 0.0
    %176 = vmatmul.mubr.f32.gmra.mrb[0].mxu0 %v85
    %v177 = vpop.f32.mrb[0].mxu0
    %v178 = vadd.f32 %v69, %v177
    %v179 = vpop.f32.mrb[0].mxu0
    %180 = vdwg.mxu0
    %v181 = vmax.f32 %v158, 0.0
    %v182 = vmax.f32 %v163, 0.0
    %v183 = vmax.f32 %v168, 0.0
    %v184 = vmax.f32 %v173, 0.0
    %v185 = vmax.f32 %v178, 0.0
    %v186 = vld [vmem:[%s3] sm:$0xff]
    %v187 = vld [vmem:[%s3 + $0x8] sm:$0xff]
    %v188 = vld [vmem:[%s3 + $0x10] sm:$0xf]
    %v189 = vld [vmem:[%s4] sm:$0xff]
    %v190 = vld [vmem:[%s4 + $0x8] sm:$0xff]
    %v191 = vld [vmem:[%s4 + $0x10] sm:$0xf]
    %193 = vset.pattern.permute.xlu0 0
    %194 = vperm.xlu0 %193, %v189
    %v195 = vpop.permute.xlu0 %194
    %198 = vset.pattern.permute.xlu0 0
    %199 = vperm.xlu0 %198, %v190
    %v200 = vpop.permute.xlu0 %199
    %203 = vset.pattern.permute.xlu0 0
    %204 = vperm.xlu0 %203, %v191
    %v205 = vpop.permute.xlu0 %204
    %vm207 = vcmask 310272
    %v209 = vsel %vm207, %v186, 0
    %v212 = vsel %vm207, %v187, 0
    %v215 = vsel %vm207, %v188, 0
    %vm217 = vcmask 1045504
    %v219 = vsel %vm217, %v185, 0
    %221 = vmatprep.subr.mxu0 0.0
    %222 = vmatpush1.msra.mxu0 %v181
    %223 = vmatprep.subr.mxu0 0.0
    %224 = vmatpush1.msra.mxu0 %v182
    %225 = vmatprep.subr.mxu0 0.0
    %226 = vmatpush1.msra.mxu0 %v183
    %227 = vmatprep.subr.mxu0 0.0
    %228 = vmatpush1.msra.mxu0 %v184
    %229 = vmatprep.subr.mxu0 0.0
    %230 = vmatpush1.msra.mxu0 %v219
    %231 = vmatprep.subr.mxu0 0.0
    %232 = vmatpush1.msra.mxu0 0.0
    %233 = vmatprep.subr.mxu0 0.0
    %234 = vmatpush1.msra.mxu0 0.0
    %235 = vmatprep.subr.mxu0 0.0
    %236 = vmatpush1.msra.mxu0 0.0
    %237 = vmatprep.subr.mxu0 0.0
    %238 = vmatpush1.msra.mxu0 0.0
    %239 = vmatprep.subr.mxu0 0.0
    %240 = vmatpush1.msra.mxu0 0.0
    %241 = vmatprep.subr.mxu0 0.0
    %242 = vmatpush1.msra.mxu0 0.0
    %243 = vmatprep.subr.mxu0 0.0
    %244 = vmatpush1.msra.mxu0 0.0
    %245 = vmatprep.subr.mxu0 0.0
    %246 = vmatpush1.msra.mxu0 0.0
    %247 = vmatprep.subr.mxu0 0.0
    %248 = vmatpush1.msra.mxu0 0.0
    %249 = vmatprep.subr.mxu0 0.0
    %250 = vmatpush1.msra.mxu0 0.0
    %251 = vmatprep.subr.mxu0 0.0
    %252 = vmatpush1.msra.mxu0 0.0
    %253 = vmatprep.subr.mxu0 0.0
    %254 = vmatpush1.msra.mxu0 0.0
    %255 = vmatprep.subr.mxu0 0.0
    %256 = vmatpush1.msra.mxu0 0.0
    %257 = vmatprep.subr.mxu0 0.0
    %258 = vmatpush1.msra.mxu0 0.0
    %259 = vmatprep.subr.mxu0 0.0
    %260 = vmatpush1.msra.mxu0 0.0
    %261 = vmatprep.subr.mxu0 0.0
    %262 = vmatpush1.msra.mxu0 0.0
    %263 = vmatprep.subr.mxu0 0.0
    %264 = vmatpush1.msra.mxu0 0.0
    %265 = vmatprep.subr.mxu0 0.0
    %266 = vmatpush1.msra.mxu0 0.0
    %267 = vmatprep.subr.mxu0 0.0
    %268 = vmatpush1.msra.mxu0 0.0
    %269 = vmatprep.subr.mxu0 0.0
    %270 = vmatpush1.msra.mxu0 0.0
    %271 = vmatprep.subr.mxu0 0.0
    %272 = vmatpush1.msra.mxu0 0.0
    %273 = vmatprep.subr.mxu0 0.0
    %274 = vmatpush1.msra.mxu0 0.0
    %275 = vmatprep.subr.mxu0 0.0
    %276 = vmatpush1.msra.mxu0 0.0
    %277 = vmatprep.subr.mxu0 0.0
    %278 = vmatpush1.msra.mxu0 0.0
    %279 = vmatprep.subr.mxu0 0.0
    %280 = vmatpush1.msra.mxu0 0.0
    %281 = vmatprep.subr.mxu0 0.0
    %282 = vmatpush1.msra.mxu0 0.0
    %283 = vmatprep.subr.mxu0 0.0
    %284 = vmatpush1.msra.mxu0 0.0
    %285 = vmatprep.mubr.f32.mxu0 0.0
    %286 = vmatmul.mubr.f32.gmra.mrb[0].mxu0 %v209
    %v287 = vpop.f32.mrb[0].mxu0
    %v288 = vadd.f32 %v195, %v287
    %v289 = vpop.f32.mrb[0].mxu0
    %290 = vmatprep.mubr.f32.mxu0 0.0
    %291 = vmatmul.mubr.f32.gmra.mrb[0].mxu0 %v212
    %v292 = vpop.f32.mrb[0].mxu0
    %v293 = vadd.f32 %v200, %v292
    %v294 = vpop.f32.mrb[0].mxu0
    %295 = vmatprep.mubr.f32.mxu0 0.0
    %296 = vmatmul.mubr.f32.gmra.mrb[0].mxu0 %v215
    %v297 = vpop.f32.mrb[0].mxu0
    %v298 = vadd.f32 %v205, %v297
    %v299 = vpop.f32.mrb[0].mxu0
    %300 = vdwg.mxu0
    %v301 = vmax.f32 %v288, 0.0
    %v302 = vmax.f32 %v293, 0.0
    %v303 = vmax.f32 %v298, 0.0
    %v304 = vld [vmem:[%s5] sm:$0x3]
    %v305 = vld [vmem:[%s6] sm:$0x3]
    %307 = vset.pattern.permute.xlu0 0
    %308 = vperm.xlu0 %307, %v305
    %v309 = vpop.permute.xlu0 %308
    %vm311 = vcmask 162816
    %v313 = vsel %vm311, %v304, 0
    %vm315 = vcmask 1043456
    %v317 = vsel %vm315, %v303, 0
    %319 = vmatprep.subr.mxu0 0.0
    %320 = vmatpush1.msra.mxu0 %v301
    %321 = vmatprep.subr.mxu0 0.0
    %322 = vmatpush1.msra.mxu0 %v302
    %323 = vmatprep.subr.mxu0 0.0
    %324 = vmatpush1.msra.mxu0 %v317
    %325 = vmatprep.subr.mxu0 0.0
    %326 = vmatpush1.msra.mxu0 0.0
    %327 = vmatprep.subr.mxu0 0.0
    %328 = vmatpush1.msra.mxu0 0.0
    %329 = vmatprep.subr.mxu0 0.0
    %330 = vmatpush1.msra.mxu0 0.0
    %331 = vmatprep.subr.mxu0 0.0
    %332 = vmatpush1.msra.mxu0 0.0
    %333 = vmatprep.subr.mxu0 0.0
    %334 = vmatpush1.msra.mxu0 0.0
    %335 = vmatprep.subr.mxu0 0.0
    %336 = vmatpush1.msra.mxu0 0.0
    %337 = vmatprep.subr.mxu0 0.0
    %338 = vmatpush1.msra.mxu0 0.0
    %339 = vmatprep.subr.mxu0 0.0
    %340 = vmatpush1.msra.mxu0 0.0
    %341 = vmatprep.subr.mxu0 0.0
    %342 = vmatpush1.msra.mxu0 0.0
    %343 = vmatprep.subr.mxu0 0.0
    %344 = vmatpush1.msra.mxu0 0.0
    %345 = vmatprep.subr.mxu0 0.0
    %346 = vmatpush1.msra.mxu0 0.0
    %347 = vmatprep.subr.mxu0 0.0
    %348 = vmatpush1.msra.mxu0 0.0
    %349 = vmatprep.subr.mxu0 0.0
    %350 = vmatpush1.msra.mxu0 0.0
    %351 = vmatprep.subr.mxu0 0.0
    %352 = vmatpush1.msra.mxu0 0.0
    %353 = vmatprep.subr.mxu0 0.0
    %354 = vmatpush1.msra.mxu0 0.0
    %355 = vmatprep.subr.mxu0 0.0
    %356 = vmatpush1.msra.mxu0 0.0
    %357 = vmatprep.subr.mxu0 0.0
    %358 = vmatpush1.msra.mxu0 0.0
    %359 = vmatprep.subr.mxu0 0.0
    %360 = vmatpush1.msra.mxu0 0.0
    %361 = vmatprep.subr.mxu0 0.0
    %362 = vmatpush1.msra.mxu0 0.0
    %363 = vmatprep.subr.mxu0 0.0
    %364 = vmatpush1.msra.mxu0 0.0
    %365 = vmatprep.subr.mxu0 0.0
    %366 = vmatpush1.msra.mxu0 0.0
    %367 = vmatprep.subr.mxu0 0.0
    %368 = vmatpush1.msra.mxu0 0.0
    %369 = vmatprep.subr.mxu0 0.0
    %370 = vmatpush1.msra.mxu0 0.0
    %371 = vmatprep.subr.mxu0 0.0
    %372 = vmatpush1.msra.mxu0 0.0
    %373 = vmatprep.subr.mxu0 0.0
    %374 = vmatpush1.msra.mxu0 0.0
    %375 = vmatprep.subr.mxu0 0.0
    %376 = vmatpush1.msra.mxu0 0.0
    %377 = vmatprep.subr.mxu0 0.0
    %378 = vmatpush1.msra.mxu0 0.0
    %379 = vmatprep.subr.mxu0 0.0
    %380 = vmatpush1.msra.mxu0 0.0
    %381 = vmatprep.subr.mxu0 0.0
    %382 = vmatpush1.msra.mxu0 0.0
    %383 = vmatprep.mubr.f32.mxu0 0.0
    %384 = vmatmul.mubr.f32.gmra.mrb[0].mxu0 %v313
    %v385 = vpop.f32.mrb[0].mxu0
    %v386 = vadd.f32 %v309, %v385
    %v387 = vpop.f32.mrb[0].mxu0
    %388 = vdwg.mxu0
    %v390 = vrot.slane %v386, 7
    %v392 = vsub.f32 %v386, %v390
    %v393 = vmax.f32 %v392, 0.0
    %v394 = vand.u32 2147483647, %v392
    %v395 = vsub.f32 0.0, %v394
    %v396 = vmul.f32 %v395, 1.442695
    %v397 = vpow.pop %v396
    %v398 = vadd.f32 %v397, 1.0
    %v399 = vlog2.pop %v398
    %v400 = vmul.f32 %v399, 0.6931472
    %v401 = vmul.f32 -0.5, %v397
    %v402 = vadd.f32 %v401, 1.0
    %v403 = vmul.f32 %v402, %v397
    %v404 = vand.u32 2147483647, %v397
    %vm405 = vcmp.lt.f32.partialorder %v404, 0.0004427343
    %v406 = vsel %vm405, %v403, %v400
    %v407 = vadd.f32 %v393, %v406
    %v409 = vrot.slane %v407, 1
    %v411 = vadd.f32 %v386, %v409
    %v412 = vlaneseq
    %v413 = vshrl.u32 %v412, 7
    %v414 = vsub.s32 0, %v413
    %v415 = vrot.slane %v411, %v414
    %v416 = vsub.f32 %v386, %v415
    %vm417 = vcmask 9216
    %418 = vst.msk [vmem:[#allocation2] sm:$0x3] %vm417, %v416
    // Predicated region
    $region30: #{tpu_custom_call.1} parent=1 // pred_check
      _
    $region31: #{tpu_custom_call.1} parent=1 // pred_check_branch
      %420 = sbr.rel (0) target = $region33
    $region32: #{tpu_custom_call.1} parent=1 // pred_region
      %s422 = ssub.s32 32, 32
      %423 = vsyncadd [#allocation3], %s422
      %s425 = sshll.u32 [#allocation2], 4
      %s426 = int_to_ptr.vmem [resolvable:$true] %s425
      %428 = dma.vmem_to_hbm [thread:$0]  %s426, 32, %s7, [#allocation3]
    $region33: #{tpu_custom_call.1} parent=1 // pred_fallthru
      _
    // Predicated region
    $region34: #{tpu_custom_call.1} parent=1 // pred_check
      _
    $region35: #{tpu_custom_call.1} parent=1 // pred_check_branch
      %430 = sbr.rel (0) target = $region37
    $region36: #{tpu_custom_call.1} parent=1 // pred_region
      %431 = dma.done [#allocation3], 32
    $region37: #{tpu_custom_call.1} parent=1 // pred_fallthru
      _
    %432 = vsyncpa [#allocation3], 1

</llo_original>
